<compile_context>
chip_gen: v7x
topology: tpu7x:2x2x1
jax: 0.10.0
libtpu: 0.0.40
codegen_flags: <defaults>
</compile_context>

<pallas_src>
import jax
import jax.numpy as jnp
from jax.experimental import pallas as pl
from jax.experimental.pallas import tpu as pltpu


def _round_up(x: int, m: int) -> int:
    return ((x + m - 1) // m) * m


# ----------------------------- Pallas kernel ------------------------------- #
def _spmm_kernel(adj_ref, emb_ref, out_ref, acc_ref):
    """One (row-tile, k-tile) grid step of out = adj @ embeds."""

    @pl.when(pl.program_id(1) == 0)
    def _init():
        acc_ref[...] = jnp.zeros_like(acc_ref)

    acc_ref[...] += jnp.dot(
        adj_ref[...], emb_ref[...], preferred_element_type=jnp.float32
    )

    @pl.when(pl.program_id(1) == pl.num_programs(1) - 1)
    def _finalize():
        out_ref[...] = acc_ref[...].astype(out_ref.dtype)


def gcn_layer(adj, embeds, *, tm=512, tk=512):
    """out[n, e] = sum_k adj[n, k] * embeds[k, e]  (== torch.spmm(adj, embeds))."""
    M, K = adj.shape
    K2, E = embeds.shape
    assert K == K2, (adj.shape, embeds.shape)

    # Row tile: as big as the problem allows (capped at `tm`), multiple of 8
    # sublanes so the (8, 128) block constraint is satisfied.
    tm = min(tm, _round_up(M, 8))
    # Reduction tile: single full-K block when it fits in VMEM, else multiples
    # of 128 lanes (512 default) with accumulation across the k grid axis.
    if K <= tk:
        tk = K

    Mp = _round_up(M, tm)
    Kp = _round_up(K, tk)

    # Zero-pad only when the tiles do not divide the problem.  Zeros on the K
    # axis do not change the matmul result; padded rows are sliced off below.
    if (Mp, Kp) != (M, K):
        adj = jnp.pad(adj, ((0, Mp - M), (0, Kp - K)))
    if Kp != K:
        embeds = jnp.pad(embeds, ((0, Kp - K), (0, 0)))

    grid = (Mp // tm, Kp // tk)
    cost = pl.CostEstimate(
        flops=2 * Mp * Kp * E,
        transcendentals=0,
        bytes_accessed=4 * (Mp * Kp + Kp * E + Mp * E),
    )

    out = pl.pallas_call(
        _spmm_kernel,
        out_shape=jax.ShapeDtypeStruct((Mp, E), embeds.dtype),
        grid=grid,
        in_specs=[
            pl.BlockSpec((tm, tk), lambda i, k: (i, k)),  # adjacency row tile
            pl.BlockSpec((tk, E), lambda i, k: (k, 0)),   # embedding K-slab (resident in k)
        ],
        out_specs=pl.BlockSpec((tm, E), lambda i, k: (i, 0)),
        scratch_shapes=[pltpu.VMEM((tm, E), jnp.float32)],
        compiler_params=pltpu.CompilerParams(
            dimension_semantics=("parallel", "arbitrary"),
        ),
        cost_estimate=cost,
    )(adj, embeds)
    return out[:M] if Mp != M else out


# ----------------------------------- Main ----------------------------------- #
if __name__ == "__main__":
    N, E = 256, 32          # nodes, embedding size
    NNZ = 1024              # random directed edges before symmetrization

    key = jax.random.PRNGKey(0)
    k_src, k_dst, k_emb = jax.random.split(key, 3)

    # Build a sparse adjacency in COO form (what torch.spmm consumes), then
    # densify + symmetrically normalize it (standard GCN \hat{A}).
    src = jax.random.randint(k_src, (NNZ,), 0, N, jnp.int32)
    dst = jax.random.randint(k_dst, (NNZ,), 0, N, jnp.int32)
    a = jnp.zeros((N, N), jnp.float32).at[src, dst].set(1.0)
    a = jnp.maximum(jnp.maximum(a, a.T), jnp.eye(N, dtype=jnp.float32))
    d_inv_sqrt = 1.0 / jnp.sqrt(jnp.sum(a, axis=1))
    adj = a * d_inv_sqrt[:, None] * d_inv_sqrt[None, :]

    embeds = jax.random.normal(k_emb, (N, E), jnp.float32)

    out = gcn_layer(adj, embeds)
    jax.block_until_ready(out)

    ref = adj @ embeds
    assert out.shape == (N, E)
    assert bool(jnp.all(jnp.isfinite(out)))
    assert bool(jnp.allclose(out, ref, atol=1e-4, rtol=1e-4)), float(
        jnp.max(jnp.abs(out - ref))
    )
    print("KERNEL_OK")
</pallas_src>

<mosaic_0001>
module attributes {stable_mosaic.version = 11 : i64} {
  func.func @_spmm_kernel(%arg0: i32, %arg1: i32, %arg2: memref<256x256xf32, #tpu.memory_space<vmem>>, %arg3: memref<256x32xf32, #tpu.memory_space<vmem>>, %arg4: memref<256x32xf32, #tpu.memory_space<vmem>>, %arg5: memref<256x32xf32, #tpu.memory_space<vmem>>) attributes {dimension_semantics = [#tpu.dimension_semantics<parallel>, #tpu.dimension_semantics<arbitrary>], iteration_bounds = array<i64: 1, 1>, scalar_prefetch = 0 : i64, scratch_operands = 1 : i64, tpu.core_type = #tpu.core_type<tc>, window_params = [{transform_indices = @transform_0, window_bounds = array<i64: 256, 256>}, {transform_indices = @transform_1, window_bounds = array<i64: 256, 32>}, {transform_indices = @transform_2, window_bounds = array<i64: 256, 32>}]} {
    %c0_i32 = arith.constant 0 : i32
    %0 = arith.cmpi eq, %arg1, %c0_i32 : i32
    %1 = arith.extui %0 : i1 to i32
    %c0_i32_0 = arith.constant 0 : i32
    %2 = arith.cmpi ne, %1, %c0_i32_0 : i32
    scf.if %2 {
      %cst_10 = arith.constant 0.000000e+00 : f32
      %12 = vector.broadcast %cst_10 : f32 to vector<256x32xf32>
      %c0_11 = arith.constant 0 : index
      %c0_12 = arith.constant 0 : index
      %13 = vector.load %arg5[%c0_11, %c0_12] : memref<256x32xf32, #tpu.memory_space<vmem>>, vector<256x32xf32>
      tpu.vector_store %arg5[%c0_11, %c0_12], %12 {strides = array<i32>} : memref<256x32xf32, #tpu.memory_space<vmem>>, vector<256x32xf32>,
    } else {
    }
    %c0 = arith.constant 0 : index
    %c0_1 = arith.constant 0 : index
    %3 = vector.load %arg5[%c0, %c0_1] : memref<256x32xf32, #tpu.memory_space<vmem>>, vector<256x32xf32>
    %c0_2 = arith.constant 0 : index
    %c0_3 = arith.constant 0 : index
    %4 = vector.load %arg2[%c0_2, %c0_3] : memref<256x256xf32, #tpu.memory_space<vmem>>, vector<256x256xf32>
    %c0_4 = arith.constant 0 : index
    %c0_5 = arith.constant 0 : index
    %5 = vector.load %arg3[%c0_4, %c0_5] : memref<256x32xf32, #tpu.memory_space<vmem>>, vector<256x32xf32>
    %cst = arith.constant dense<0.000000e+00> : vector<256x32xf32>
    %6 = tpu.matmul %4, %5, %cst {dimension_numbers = #tpu.dot_dimension_numbers<[1], [0], [0], [1], [0, 0, 1, 1], [], []>} : vector<256x256xf32>, vector<256x32xf32>, vector<256x32xf32> -> vector<256x32xf32>
    %7 = arith.addf %3, %6 : vector<256x32xf32>
    %c0_6 = arith.constant 0 : index
    %c0_7 = arith.constant 0 : index
    %8 = vector.load %arg5[%c0_6, %c0_7] : memref<256x32xf32, #tpu.memory_space<vmem>>, vector<256x32xf32>
    tpu.vector_store %arg5[%c0_6, %c0_7], %7 {strides = array<i32>} : memref<256x32xf32, #tpu.memory_space<vmem>>, vector<256x32xf32>,
    %c0_i32_8 = arith.constant 0 : i32
    %9 = arith.cmpi eq, %arg1, %c0_i32_8 : i32
    %10 = arith.extui %9 : i1 to i32
    %c0_i32_9 = arith.constant 0 : i32
    %11 = arith.cmpi ne, %10, %c0_i32_9 : i32
    scf.if %11 {
      %c0_10 = arith.constant 0 : index
      %c0_11 = arith.constant 0 : index
      %12 = vector.load %arg5[%c0_10, %c0_11] : memref<256x32xf32, #tpu.memory_space<vmem>>, vector<256x32xf32>
      %c0_12 = arith.constant 0 : index
      %c0_13 = arith.constant 0 : index
      %13 = vector.load %arg4[%c0_12, %c0_13] : memref<256x32xf32, #tpu.memory_space<vmem>>, vector<256x32xf32>
      tpu.vector_store %arg4[%c0_12, %c0_13], %12 {strides = array<i32>} : memref<256x32xf32, #tpu.memory_space<vmem>>, vector<256x32xf32>,
    } else {
    }
    return
  }
  func.func @transform_0(%arg0: i32, %arg1: i32) -> (i32, i32) {
    %c0_i32 = arith.constant 0 : i32
    return %arg0, %arg1 : i32, i32
  }
  func.func @transform_1(%arg0: i32, %arg1: i32) -> (i32, i32) {
    %c0_i32 = arith.constant 0 : i32
    %c0_i32_0 = arith.constant 0 : i32
    return %arg1, %c0_i32 : i32, i32
  }
  func.func @transform_2(%arg0: i32, %arg1: i32) -> (i32, i32) {
    %c0_i32 = arith.constant 0 : i32
    %c0_i32_0 = arith.constant 0 : i32
    return %arg0, %c0_i32 : i32, i32
  }
}

</mosaic_0001>

<llo_original>
// kernel: tpu_custom_call.1
$region0: #{tpu_custom_call.1}
  #allocation0 [shape = 'u32[]', space=smem, size = 0x4, offset = 0x4, fixed_abs, tag = 'smem constant byte address 0x4 - core index']
  #allocation1 [shape = 'u32[144,128]{1,0:T(1,128)}', space=vmem, size = 0x12000, scoped, tag = 'internal scratch']
  #allocation2 [shape = 'f32[256,32]{1,0:T(8,128)}', space=vmem, size = 0x20000, scoped, tag = 'scratch operand']
  %s0 = inlined_call_operand.hbm [shape: f32[256,256], index: 0, kind: input, shape index: {}]
  %s1 = inlined_call_operand.vmem [shape: f32[256,32], index: 1, kind: input, shape index: {}]
  %s2 = inlined_call_operand.vmem [shape: f32[256,32], index: 2, kind: output, shape index: {}]
  %s3 = sld [smem:[#allocation0]]
  $region30: #{tpu_custom_call.1} parent=0
    _
  %s5 = ssub.s32 1, %s3
  %s6 = scalar_select 0, %s5, %s3
  $region1: #{tpu_custom_call.1} parent=0
    #allocation3 [shape = 'u8[262144]{0}', space=vmem, size = 0x40000, scoped, tag = 'input window, operand 0, single buffered']
    #allocation4 [shape = 's32[1]{0}', space=sflag, size = 0x4, scoped, tag = 'scoped memory for tpu_custom_call.1']
    %7 = vsyncpa [#allocation4], 0
    // Predicated region
    $region2: #{tpu_custom_call.1} parent=1 // pred_check
      _
    $region3: #{tpu_custom_call.1} parent=1 // pred_check_branch
      %9 = sbr.rel (0) target = $region5
    $region4: #{tpu_custom_call.1} parent=1 // pred_region
      %s11 = ssub.s32 8192, 8192
      %12 = vsyncadd [#allocation4], %s11
      %s13 = sshll.u32 [#allocation3], 4
      %s14 = int_to_ptr.vmem [resolvable:$true] %s13
      %19 = dma.hbm_to_vmem [thread:$0]  %s0, 8192, %s14, [#allocation4], 256, 256, 16
    $region5: #{tpu_custom_call.1} parent=1 // pred_fallthru
      _
    // Predicated region
    $region6: #{tpu_custom_call.1} parent=1 // pred_check
      _
    $region7: #{tpu_custom_call.1} parent=1 // pred_check_branch
      %21 = sbr.rel (0) target = $region9
    $region8: #{tpu_custom_call.1} parent=1 // pred_region
      _
    $region9: #{tpu_custom_call.1} parent=1 // pred_fallthru
      _
    // Predicated region
    $region10: #{tpu_custom_call.1} parent=1 // pred_check
      _
    $region11: #{tpu_custom_call.1} parent=1 // pred_check_branch
      %23 = sbr.rel (0) target = $region13
    $region12: #{tpu_custom_call.1} parent=1 // pred_region
      %24 = dma.done [#allocation4], 8192
    $region13: #{tpu_custom_call.1} parent=1 // pred_fallthru
      _
    %p25 = scmp.eq.s32.totalorder 0, 0
    // Predicated region
    $region14: #{tpu_custom_call.1} parent=1 // pred_check
      %p26 = pneg %p25
    $region15: #{tpu_custom_call.1} parent=1 // pred_check_branch
      %28 = sbr.rel (%p26) target = $region17
    $region16: #{tpu_custom_call.1} parent=1 // pred_region
      %vm29 = vcmask 261120
      %30 = vst.msk [vmem:[#allocation2] sm:$0xff] %vm29, 0.0
      %31 = vst.msk [vmem:[#allocation2 + $0x8] sm:$0xff] %vm29, 0.0
      %32 = vst.msk [vmem:[#allocation2 + $0x10] sm:$0xff] %vm29, 0.0
      %33 = vst.msk [vmem:[#allocation2 + $0x18] sm:$0xff] %vm29, 0.0
      %34 = vst.msk [vmem:[#allocation2 + $0x20] sm:$0xff] %vm29, 0.0
      %35 = vst.msk [vmem:[#allocation2 + $0x28] sm:$0xff] %vm29, 0.0
      %36 = vst.msk [vmem:[#allocation2 + $0x30] sm:$0xff] %vm29, 0.0
      %37 = vst.msk [vmem:[#allocation2 + $0x38] sm:$0xff] %vm29, 0.0
      %38 = vst.msk [vmem:[#allocation2 + $0x40] sm:$0xff] %vm29, 0.0
      %39 = vst.msk [vmem:[#allocation2 + $0x48] sm:$0xff] %vm29, 0.0
      %40 = vst.msk [vmem:[#allocation2 + $0x50] sm:$0xff] %vm29, 0.0
      %41 = vst.msk [vmem:[#allocation2 + $0x58] sm:$0xff] %vm29, 0.0
      %42 = vst.msk [vmem:[#allocation2 + $0x60] sm:$0xff] %vm29, 0.0
      %43 = vst.msk [vmem:[#allocation2 + $0x68] sm:$0xff] %vm29, 0.0
      %44 = vst.msk [vmem:[#allocation2 + $0x70] sm:$0xff] %vm29, 0.0
      %45 = vst.msk [vmem:[#allocation2 + $0x78] sm:$0xff] %vm29, 0.0
      %46 = vst.msk [vmem:[#allocation2 + $0x80] sm:$0xff] %vm29, 0.0
      %47 = vst.msk [vmem:[#allocation2 + $0x88] sm:$0xff] %vm29, 0.0
      %48 = vst.msk [vmem:[#allocation2 + $0x90] sm:$0xff] %vm29, 0.0
      %49 = vst.msk [vmem:[#allocation2 + $0x98] sm:$0xff] %vm29, 0.0
      %50 = vst.msk [vmem:[#allocation2 + $0xa0] sm:$0xff] %vm29, 0.0
      %51 = vst.msk [vmem:[#allocation2 + $0xa8] sm:$0xff] %vm29, 0.0
      %52 = vst.msk [vmem:[#allocation2 + $0xb0] sm:$0xff] %vm29, 0.0
      %53 = vst.msk [vmem:[#allocation2 + $0xb8] sm:$0xff] %vm29, 0.0
      %54 = vst.msk [vmem:[#allocation2 + $0xc0] sm:$0xff] %vm29, 0.0
      %55 = vst.msk [vmem:[#allocation2 + $0xc8] sm:$0xff] %vm29, 0.0
      %56 = vst.msk [vmem:[#allocation2 + $0xd0] sm:$0xff] %vm29, 0.0
      %57 = vst.msk [vmem:[#allocation2 + $0xd8] sm:$0xff] %vm29, 0.0
      %58 = vst.msk [vmem:[#allocation2 + $0xe0] sm:$0xff] %vm29, 0.0
      %59 = vst.msk [vmem:[#allocation2 + $0xe8] sm:$0xff] %vm29, 0.0
      %60 = vst.msk [vmem:[#allocation2 + $0xf0] sm:$0xff] %vm29, 0.0
      %61 = vst.msk [vmem:[#allocation2 + $0xf8] sm:$0xff] %vm29, 0.0
    $region17: #{tpu_custom_call.1} parent=1 // pred_fallthru
      _
    %v62 = vld [vmem:[#allocation2] sm:$0xff]
    %v63 = vld [vmem:[#allocation2 + $0x8] sm:$0xff]
    %v64 = vld [vmem:[#allocation2 + $0x10] sm:$0xff]
    %v65 = vld [vmem:[#allocation2 + $0x18] sm:$0xff]
    %v66 = vld [vmem:[#allocation2 + $0x20] sm:$0xff]
    %v67 = vld [vmem:[#allocation2 + $0x28] sm:$0xff]
    %v68 = vld [vmem:[#allocation2 + $0x30] sm:$0xff]
    %v69 = vld [vmem:[#allocation2 + $0x38] sm:$0xff]
    %v70 = vld [vmem:[#allocation2 + $0x40] sm:$0xff]
    %v71 = vld [vmem:[#allocation2 + $0x48] sm:$0xff]
    %v72 = vld [vmem:[#allocation2 + $0x50] sm:$0xff]
    %v73 = vld [vmem:[#allocation2 + $0x58] sm:$0xff]
    %v74 = vld [vmem:[#allocation2 + $0x60] sm:$0xff]
    %v75 = vld [vmem:[#allocation2 + $0x68] sm:$0xff]
    %v76 = vld [vmem:[#allocation2 + $0x70] sm:$0xff]
    %v77 = vld [vmem:[#allocation2 + $0x78] sm:$0xff]
    %v78 = vld [vmem:[#allocation2 + $0x80] sm:$0xff]
    %v79 = vld [vmem:[#allocation2 + $0x88] sm:$0xff]
    %v80 = vld [vmem:[#allocation2 + $0x90] sm:$0xff]
    %v81 = vld [vmem:[#allocation2 + $0x98] sm:$0xff]
    %v82 = vld [vmem:[#allocation2 + $0xa0] sm:$0xff]
    %v83 = vld [vmem:[#allocation2 + $0xa8] sm:$0xff]
    %v84 = vld [vmem:[#allocation2 + $0xb0] sm:$0xff]
    %v85 = vld [vmem:[#allocation2 + $0xb8] sm:$0xff]
    %v86 = vld [vmem:[#allocation2 + $0xc0] sm:$0xff]
    %v87 = vld [vmem:[#allocation2 + $0xc8] sm:$0xff]
    %v88 = vld [vmem:[#allocation2 + $0xd0] sm:$0xff]
    %v89 = vld [vmem:[#allocation2 + $0xd8] sm:$0xff]
    %v90 = vld [vmem:[#allocation2 + $0xe0] sm:$0xff]
    %v91 = vld [vmem:[#allocation2 + $0xe8] sm:$0xff]
    %v92 = vld [vmem:[#allocation2 + $0xf0] sm:$0xff]
    %v93 = vld [vmem:[#allocation2 + $0xf8] sm:$0xff]
    %v94 = vld [vmem:[#allocation3] sm:$0xff]
    %v95 = vld [vmem:[#allocation3 + $0x8] sm:$0xff]
    %v96 = vld [vmem:[#allocation3 + $0x10] sm:$0xff]
    %v97 = vld [vmem:[#allocation3 + $0x18] sm:$0xff]
    %v98 = vld [vmem:[#allocation3 + $0x20] sm:$0xff]
    %v99 = vld [vmem:[#allocation3 + $0x28] sm:$0xff]
    %v100 = vld [vmem:[#allocation3 + $0x30] sm:$0xff]
    %v101 = vld [vmem:[#allocation3 + $0x38] sm:$0xff]
    %v102 = vld [vmem:[#allocation3 + $0x40] sm:$0xff]
    %v103 = vld [vmem:[#allocation3 + $0x48] sm:$0xff]
    %v104 = vld [vmem:[#allocation3 + $0x50] sm:$0xff]
    %v105 = vld [vmem:[#allocation3 + $0x58] sm:$0xff]
    %v106 = vld [vmem:[#allocation3 + $0x60] sm:$0xff]
    %v107 = vld [vmem:[#allocation3 + $0x68] sm:$0xff]
    %v108 = vld [vmem:[#allocation3 + $0x70] sm:$0xff]
    %v109 = vld [vmem:[#allocation3 + $0x78] sm:$0xff]
    %v110 = vld [vmem:[#allocation3 + $0x80] sm:$0xff]
    %v111 = vld [vmem:[#allocation3 + $0x88] sm:$0xff]
    %v112 = vld [vmem:[#allocation3 + $0x90] sm:$0xff]
    %v113 = vld [vmem:[#allocation3 + $0x98] sm:$0xff]
    %v114 = vld [vmem:[#allocation3 + $0xa0] sm:$0xff]
    %v115 = vld [vmem:[#allocation3 + $0xa8] sm:$0xff]
    %v116 = vld [vmem:[#allocation3 + $0xb0] sm:$0xff]
    %v117 = vld [vmem:[#allocation3 + $0xb8] sm:$0xff]
    %v118 = vld [vmem:[#allocation3 + $0xc0] sm:$0xff]
    %v119 = vld [vmem:[#allocation3 + $0xc8] sm:$0xff]
    %v120 = vld [vmem:[#allocation3 + $0xd0] sm:$0xff]
    %v121 = vld [vmem:[#allocation3 + $0xd8] sm:$0xff]
    %v122 = vld [vmem:[#allocation3 + $0xe0] sm:$0xff]
    %v123 = vld [vmem:[#allocation3 + $0xe8] sm:$0xff]
    %v124 = vld [vmem:[#allocation3 + $0xf0] sm:$0xff]
    %v125 = vld [vmem:[#allocation3 + $0xf8] sm:$0xff]
    %v126 = vld [vmem:[#allocation3 + $0x100] sm:$0xff]
    %v127 = vld [vmem:[#allocation3 + $0x108] sm:$0xff]
    %v128 = vld [vmem:[#allocation3 + $0x110] sm:$0xff]
    %v129 = vld [vmem:[#allocation3 + $0x118] sm:$0xff]
    %v130 = vld [vmem:[#allocation3 + $0x120] sm:$0xff]
    %v131 = vld [vmem:[#allocation3 + $0x128] sm:$0xff]
    %v132 = vld [vmem:[#allocation3 + $0x130] sm:$0xff]
    %v133 = vld [vmem:[#allocation3 + $0x138] sm:$0xff]
    %v134 = vld [vmem:[#allocation3 + $0x140] sm:$0xff]
    %v135 = vld [vmem:[#allocation3 + $0x148] sm:$0xff]
    %v136 = vld [vmem:[#allocation3 + $0x150] sm:$0xff]
    %v137 = vld [vmem:[#allocation3 + $0x158] sm:$0xff]
    %v138 = vld [vmem:[#allocation3 + $0x160] sm:$0xff]
    %v139 = vld [vmem:[#allocation3 + $0x168] sm:$0xff]
    %v140 = vld [vmem:[#allocation3 + $0x170] sm:$0xff]
    %v141 = vld [vmem:[#allocation3 + $0x178] sm:$0xff]
    %v142 = vld [vmem:[#allocation3 + $0x180] sm:$0xff]
    %v143 = vld [vmem:[#allocation3 + $0x188] sm:$0xff]
    %v144 = vld [vmem:[#allocation3 + $0x190] sm:$0xff]
    %v145 = vld [vmem:[#allocation3 + $0x198] sm:$0xff]
    %v146 = vld [vmem:[#allocation3 + $0x1a0] sm:$0xff]
    %v147 = vld [vmem:[#allocation3 + $0x1a8] sm:$0xff]
    %v148 = vld [vmem:[#allocation3 + $0x1b0] sm:$0xff]
    %v149 = vld [vmem:[#allocation3 + $0x1b8] sm:$0xff]
    %v150 = vld [vmem:[#allocation3 + $0x1c0] sm:$0xff]
    %v151 = vld [vmem:[#allocation3 + $0x1c8] sm:$0xff]
    %v152 = vld [vmem:[#allocation3 + $0x1d0] sm:$0xff]
    %v153 = vld [vmem:[#allocation3 + $0x1d8] sm:$0xff]
    %v154 = vld [vmem:[#allocation3 + $0x1e0] sm:$0xff]
    %v155 = vld [vmem:[#allocation3 + $0x1e8] sm:$0xff]
    %v156 = vld [vmem:[#allocation3 + $0x1f0] sm:$0xff]
    %v157 = vld [vmem:[#allocation3 + $0x1f8] sm:$0xff]
    %v158 = vld [vmem:[%s1] sm:$0xff]
    %v159 = vld [vmem:[%s1 + $0x8] sm:$0xff]
    %v160 = vld [vmem:[%s1 + $0x10] sm:$0xff]
    %v161 = vld [vmem:[%s1 + $0x18] sm:$0xff]
    %v162 = vld [vmem:[%s1 + $0x20] sm:$0xff]
    %v163 = vld [vmem:[%s1 + $0x28] sm:$0xff]
    %v164 = vld [vmem:[%s1 + $0x30] sm:$0xff]
    %v165 = vld [vmem:[%s1 + $0x38] sm:$0xff]
    %v166 = vld [vmem:[%s1 + $0x40] sm:$0xff]
    %v167 = vld [vmem:[%s1 + $0x48] sm:$0xff]
    %v168 = vld [vmem:[%s1 + $0x50] sm:$0xff]
    %v169 = vld [vmem:[%s1 + $0x58] sm:$0xff]
    %v170 = vld [vmem:[%s1 + $0x60] sm:$0xff]
    %v171 = vld [vmem:[%s1 + $0x68] sm:$0xff]
    %v172 = vld [vmem:[%s1 + $0x70] sm:$0xff]
    %v173 = vld [vmem:[%s1 + $0x78] sm:$0xff]
    %v174 = vld [vmem:[%s1 + $0x80] sm:$0xff]
    %v175 = vld [vmem:[%s1 + $0x88] sm:$0xff]
    %v176 = vld [vmem:[%s1 + $0x90] sm:$0xff]
    %v177 = vld [vmem:[%s1 + $0x98] sm:$0xff]
    %v178 = vld [vmem:[%s1 + $0xa0] sm:$0xff]
    %v179 = vld [vmem:[%s1 + $0xa8] sm:$0xff]
    %v180 = vld [vmem:[%s1 + $0xb0] sm:$0xff]
    %v181 = vld [vmem:[%s1 + $0xb8] sm:$0xff]
    %v182 = vld [vmem:[%s1 + $0xc0] sm:$0xff]
    %v183 = vld [vmem:[%s1 + $0xc8] sm:$0xff]
    %v184 = vld [vmem:[%s1 + $0xd0] sm:$0xff]
    %v185 = vld [vmem:[%s1 + $0xd8] sm:$0xff]
    %v186 = vld [vmem:[%s1 + $0xe0] sm:$0xff]
    %v187 = vld [vmem:[%s1 + $0xe8] sm:$0xff]
    %v188 = vld [vmem:[%s1 + $0xf0] sm:$0xff]
    %v189 = vld [vmem:[%s1 + $0xf8] sm:$0xff]
    %190 = vmatprep.subr.mxu0 0.0
    %191 = vmatpush1.msra.mxu0 %v158
    %192 = vmatprep.subr.mxu0 0.0
    %193 = vmatpush1.msra.mxu0 %v159
    %194 = vmatprep.subr.mxu0 0.0
    %195 = vmatpush1.msra.mxu0 %v160
    %196 = vmatprep.subr.mxu0 0.0
    %197 = vmatpush1.msra.mxu0 %v161
    %198 = vmatprep.subr.mxu0 0.0
    %199 = vmatpush1.msra.mxu0 %v162
    %200 = vmatprep.subr.mxu0 0.0
    %201 = vmatpush1.msra.mxu0 %v163
    %202 = vmatprep.subr.mxu0 0.0
    %203 = vmatpush1.msra.mxu0 %v164
    %204 = vmatprep.subr.mxu0 0.0
    %205 = vmatpush1.msra.mxu0 %v165
    %206 = vmatprep.subr.mxu0 0.0
    %207 = vmatpush1.msra.mxu0 %v166
    %208 = vmatprep.subr.mxu0 0.0
    %209 = vmatpush1.msra.mxu0 %v167
    %210 = vmatprep.subr.mxu0 0.0
    %211 = vmatpush1.msra.mxu0 %v168
    %212 = vmatprep.subr.mxu0 0.0
    %213 = vmatpush1.msra.mxu0 %v169
    %214 = vmatprep.subr.mxu0 0.0
    %215 = vmatpush1.msra.mxu0 %v170
    %216 = vmatprep.subr.mxu0 0.0
    %217 = vmatpush1.msra.mxu0 %v171
    %218 = vmatprep.subr.mxu0 0.0
    %219 = vmatpush1.msra.mxu0 %v172
    %220 = vmatprep.subr.mxu0 0.0
    %221 = vmatpush1.msra.mxu0 %v173
    %222 = vmatprep.subr.mxu0 0.0
    %223 = vmatpush1.msra.mxu0 %v174
    %224 = vmatprep.subr.mxu0 0.0
    %225 = vmatpush1.msra.mxu0 %v175
    %226 = vmatprep.subr.mxu0 0.0
    %227 = vmatpush1.msra.mxu0 %v176
    %228 = vmatprep.subr.mxu0 0.0
    %229 = vmatpush1.msra.mxu0 %v177
    %230 = vmatprep.subr.mxu0 0.0
    %231 = vmatpush1.msra.mxu0 %v178
    %232 = vmatprep.subr.mxu0 0.0
    %233 = vmatpush1.msra.mxu0 %v179
    %234 = vmatprep.subr.mxu0 0.0
    %235 = vmatpush1.msra.mxu0 %v180
    %236 = vmatprep.subr.mxu0 0.0
    %237 = vmatpush1.msra.mxu0 %v181
    %238 = vmatprep.subr.mxu0 0.0
    %239 = vmatpush1.msra.mxu0 %v182
    %240 = vmatprep.subr.mxu0 0.0
    %241 = vmatpush1.msra.mxu0 %v183
    %242 = vmatprep.subr.mxu0 0.0
    %243 = vmatpush1.msra.mxu0 %v184
    %244 = vmatprep.subr.mxu0 0.0
    %245 = vmatpush1.msra.mxu0 %v185
    %246 = vmatprep.subr.mxu0 0.0
    %247 = vmatpush1.msra.mxu0 %v186
    %248 = vmatprep.subr.mxu0 0.0
    %249 = vmatpush1.msra.mxu0 %v187
    %250 = vmatprep.subr.mxu0 0.0
    %251 = vmatpush1.msra.mxu0 %v188
    %252 = vmatprep.subr.mxu0 0.0
    %253 = vmatpush1.msra.mxu0 %v189
    %254 = vmatprep.mubr.f32.mxu0 %v95
    %255 = vmatmul.mubr.f32.gmra.mrb[0].mxu0 %v94
    %v256 = vpop.f32.mrb[0].mxu0
    %v257 = vadd.f32 0.0, %v256
    %v258 = vpop.f32.mrb[0].mxu0
    %259 = vmatprep.mubr.f32.mxu0 %v97
    %260 = vmatmul.mubr.f32.gmra.mrb[0].mxu0 %v96
    %v261 = vpop.f32.mrb[0].mxu0
    %v262 = vadd.f32 0.0, %v261
    %v263 = vpop.f32.mrb[0].mxu0
    %264 = vmatprep.mubr.f32.mxu0 %v99
    %265 = vmatmul.mubr.f32.gmra.mrb[0].mxu0 %v98
    %v266 = vpop.f32.mrb[0].mxu0
    %v267 = vadd.f32 0.0, %v266
    %v268 = vpop.f32.mrb[0].mxu0
    %269 = vmatprep.mubr.f32.mxu0 %v101
    %270 = vmatmul.mubr.f32.gmra.mrb[0].mxu0 %v100
    %v271 = vpop.f32.mrb[0].mxu0
    %v272 = vadd.f32 0.0, %v271
    %v273 = vpop.f32.mrb[0].mxu0
    %274 = vmatprep.mubr.f32.mxu0 %v103
    %275 = vmatmul.mubr.f32.gmra.mrb[0].mxu0 %v102
    %v276 = vpop.f32.mrb[0].mxu0
    %v277 = vadd.f32 0.0, %v276
    %v278 = vpop.f32.mrb[0].mxu0
    %279 = vmatprep.mubr.f32.mxu0 %v105
    %280 = vmatmul.mubr.f32.gmra.mrb[0].mxu0 %v104
    %v281 = vpop.f32.mrb[0].mxu0
    %v282 = vadd.f32 0.0, %v281
    %v283 = vpop.f32.mrb[0].mxu0
    %284 = vmatprep.mubr.f32.mxu0 %v107
    %285 = vmatmul.mubr.f32.gmra.mrb[0].mxu0 %v106
    %v286 = vpop.f32.mrb[0].mxu0
    %v287 = vadd.f32 0.0, %v286
    %v288 = vpop.f32.mrb[0].mxu0
    %289 = vmatprep.mubr.f32.mxu0 %v109
    %290 = vmatmul.mubr.f32.gmra.mrb[0].mxu0 %v108
    %v291 = vpop.f32.mrb[0].mxu0
    %v292 = vadd.f32 0.0, %v291
    %v293 = vpop.f32.mrb[0].mxu0
    %294 = vmatprep.mubr.f32.mxu0 %v111
    %295 = vmatmul.mubr.f32.gmra.mrb[0].mxu0 %v110
    %v296 = vpop.f32.mrb[0].mxu0
    %v297 = vadd.f32 0.0, %v296
    %v298 = vpop.f32.mrb[0].mxu0
    %299 = vmatprep.mubr.f32.mxu0 %v113
    %300 = vmatmul.mubr.f32.gmra.mrb[0].mxu0 %v112
    %v301 = vpop.f32.mrb[0].mxu0
    %v302 = vadd.f32 0.0, %v301
    %v303 = vpop.f32.mrb[0].mxu0
    %304 = vmatprep.mubr.f32.mxu0 %v115
    %305 = vmatmul.mubr.f32.gmra.mrb[0].mxu0 %v114
    %v306 = vpop.f32.mrb[0].mxu0
    %v307 = vadd.f32 0.0, %v306
    %v308 = vpop.f32.mrb[0].mxu0
    %309 = vmatprep.mubr.f32.mxu0 %v117
    %310 = vmatmul.mubr.f32.gmra.mrb[0].mxu0 %v116
    %v311 = vpop.f32.mrb[0].mxu0
    %v312 = vadd.f32 0.0, %v311
    %v313 = vpop.f32.mrb[0].mxu0
    %314 = vmatprep.mubr.f32.mxu0 %v119
    %315 = vmatmul.mubr.f32.gmra.mrb[0].mxu0 %v118
    %v316 = vpop.f32.mrb[0].mxu0
    %v317 = vadd.f32 0.0, %v316
    %v318 = vpop.f32.mrb[0].mxu0
    %319 = vmatprep.mubr.f32.mxu0 %v121
    %320 = vmatmul.mubr.f32.gmra.mrb[0].mxu0 %v120
    %v321 = vpop.f32.mrb[0].mxu0
    %v322 = vadd.f32 0.0, %v321
    %v323 = vpop.f32.mrb[0].mxu0
    %324 = vmatprep.mubr.f32.mxu0 %v123
    %325 = vmatmul.mubr.f32.gmra.mrb[0].mxu0 %v122
    %v326 = vpop.f32.mrb[0].mxu0
    %v327 = vadd.f32 0.0, %v326
    %v328 = vpop.f32.mrb[0].mxu0
    %329 = vmatprep.mubr.f32.mxu0 %v125
    %330 = vmatmul.mubr.f32.gmra.mrb[0].mxu0 %v124
    %v331 = vpop.f32.mrb[0].mxu0
    %v332 = vadd.f32 0.0, %v331
    %v333 = vpop.f32.mrb[0].mxu0
    %334 = vmatprep.mubr.f32.mxu0 %v127
    %335 = vmatmul.mubr.f32.gmra.mrb[0].mxu0 %v126
    %v336 = vpop.f32.mrb[0].mxu0
    %v337 = vadd.f32 0.0, %v336
    %v338 = vpop.f32.mrb[0].mxu0
    %339 = vmatprep.mubr.f32.mxu0 %v129
    %340 = vmatmul.mubr.f32.gmra.mrb[0].mxu0 %v128
    %v341 = vpop.f32.mrb[0].mxu0
    %v342 = vadd.f32 0.0, %v341
    %v343 = vpop.f32.mrb[0].mxu0
    %344 = vmatprep.mubr.f32.mxu0 %v131
    %345 = vmatmul.mubr.f32.gmra.mrb[0].mxu0 %v130
    %v346 = vpop.f32.mrb[0].mxu0
    %v347 = vadd.f32 0.0, %v346
    %v348 = vpop.f32.mrb[0].mxu0
    %349 = vmatprep.mubr.f32.mxu0 %v133
    %350 = vmatmul.mubr.f32.gmra.mrb[0].mxu0 %v132
    %v351 = vpop.f32.mrb[0].mxu0
    %v352 = vadd.f32 0.0, %v351
    %v353 = vpop.f32.mrb[0].mxu0
    %354 = vmatprep.mubr.f32.mxu0 %v135
    %355 = vmatmul.mubr.f32.gmra.mrb[0].mxu0 %v134
    %v356 = vpop.f32.mrb[0].mxu0
    %v357 = vadd.f32 0.0, %v356
    %v358 = vpop.f32.mrb[0].mxu0
    %359 = vmatprep.mubr.f32.mxu0 %v137
    %360 = vmatmul.mubr.f32.gmra.mrb[0].mxu0 %v136
    %v361 = vpop.f32.mrb[0].mxu0
    %v362 = vadd.f32 0.0, %v361
    %v363 = vpop.f32.mrb[0].mxu0
    %364 = vmatprep.mubr.f32.mxu0 %v139
    %365 = vmatmul.mubr.f32.gmra.mrb[0].mxu0 %v138
    %v366 = vpop.f32.mrb[0].mxu0
    %v367 = vadd.f32 0.0, %v366
    %v368 = vpop.f32.mrb[0].mxu0
    %369 = vmatprep.mubr.f32.mxu0 %v141
    %370 = vmatmul.mubr.f32.gmra.mrb[0].mxu0 %v140
    %v371 = vpop.f32.mrb[0].mxu0
    %v372 = vadd.f32 0.0, %v371
    %v373 = vpop.f32.mrb[0].mxu0
    %374 = vmatprep.mubr.f32.mxu0 %v143
    %375 = vmatmul.mubr.f32.gmra.mrb[0].mxu0 %v142
    %v376 = vpop.f32.mrb[0].mxu0
    %v377 = vadd.f32 0.0, %v376
    %v378 = vpop.f32.mrb[0].mxu0
    %379 = vmatprep.mubr.f32.mxu0 %v145
    %380 = vmatmul.mubr.f32.gmra.mrb[0].mxu0 %v144
    %v381 = vpop.f32.mrb[0].mxu0
    %v382 = vadd.f32 0.0, %v381
    %v383 = vpop.f32.mrb[0].mxu0
    %384 = vmatprep.mubr.f32.mxu0 %v147
    %385 = vmatmul.mubr.f32.gmra.mrb[0].mxu0 %v146
    %v386 = vpop.f32.mrb[0].mxu0
    %v387 = vadd.f32 0.0, %v386
    %v388 = vpop.f32.mrb[0].mxu0
    %389 = vmatprep.mubr.f32.mxu0 %v149
    %390 = vmatmul.mubr.f32.gmra.mrb[0].mxu0 %v148
    %v391 = vpop.f32.mrb[0].mxu0
    %v392 = vadd.f32 0.0, %v391
    %v393 = vpop.f32.mrb[0].mxu0
    %394 = vmatprep.mubr.f32.mxu0 %v151
    %395 = vmatmul.mubr.f32.gmra.mrb[0].mxu0 %v150
    %v396 = vpop.f32.mrb[0].mxu0
    %v397 = vadd.f32 0.0, %v396
    %v398 = vpop.f32.mrb[0].mxu0
    %399 = vmatprep.mubr.f32.mxu0 %v153
    %400 = vmatmul.mubr.f32.gmra.mrb[0].mxu0 %v152
    %v401 = vpop.f32.mrb[0].mxu0
    %v402 = vadd.f32 0.0, %v401
    %v403 = vpop.f32.mrb[0].mxu0
    %404 = vmatprep.mubr.f32.mxu0 %v155
    %405 = vmatmul.mubr.f32.gmra.mrb[0].mxu0 %v154
    %v406 = vpop.f32.mrb[0].mxu0
    %v407 = vadd.f32 0.0, %v406
    %v408 = vpop.f32.mrb[0].mxu0
    %409 = vmatprep.mubr.f32.mxu0 %v157
    %410 = vmatmul.mubr.f32.gmra.mrb[0].mxu0 %v156
    %v411 = vpop.f32.mrb[0].mxu0
    %v412 = vadd.f32 0.0, %v411
    %v413 = vpop.f32.mrb[0].mxu0
    %414 = vdwg.mxu0
    %v415 = vadd.f32 %v62, %v257
    %v416 = vadd.f32 %v63, %v262
    %v417 = vadd.f32 %v64, %v267
    %v418 = vadd.f32 %v65, %v272
    %v419 = vadd.f32 %v66, %v277
    %v420 = vadd.f32 %v67, %v282
    %v421 = vadd.f32 %v68, %v287
    %v422 = vadd.f32 %v69, %v292
    %v423 = vadd.f32 %v70, %v297
    %v424 = vadd.f32 %v71, %v302
    %v425 = vadd.f32 %v72, %v307
    %v426 = vadd.f32 %v73, %v312
    %v427 = vadd.f32 %v74, %v317
    %v428 = vadd.f32 %v75, %v322
    %v429 = vadd.f32 %v76, %v327
    %v430 = vadd.f32 %v77, %v332
    %v431 = vadd.f32 %v78, %v337
    %v432 = vadd.f32 %v79, %v342
    %v433 = vadd.f32 %v80, %v347
    %v434 = vadd.f32 %v81, %v352
    %v435 = vadd.f32 %v82, %v357
    %v436 = vadd.f32 %v83, %v362
    %v437 = vadd.f32 %v84, %v367
    %v438 = vadd.f32 %v85, %v372
    %v439 = vadd.f32 %v86, %v377
    %v440 = vadd.f32 %v87, %v382
    %v441 = vadd.f32 %v88, %v387
    %v442 = vadd.f32 %v89, %v392
    %v443 = vadd.f32 %v90, %v397
    %v444 = vadd.f32 %v91, %v402
    %v445 = vadd.f32 %v92, %v407
    %v446 = vadd.f32 %v93, %v412
    %vm447 = vcmask 261120
    %448 = vst.msk [vmem:[#allocation2] sm:$0xff] %vm447, %v415
    %449 = vst.msk [vmem:[#allocation2 + $0x8] sm:$0xff] %vm447, %v416
    %450 = vst.msk [vmem:[#allocation2 + $0x10] sm:$0xff] %vm447, %v417
    %451 = vst.msk [vmem:[#allocation2 + $0x18] sm:$0xff] %vm447, %v418
    %452 = vst.msk [vmem:[#allocation2 + $0x20] sm:$0xff] %vm447, %v419
    %453 = vst.msk [vmem:[#allocation2 + $0x28] sm:$0xff] %vm447, %v420
    %454 = vst.msk [vmem:[#allocation2 + $0x30] sm:$0xff] %vm447, %v421
    %455 = vst.msk [vmem:[#allocation2 + $0x38] sm:$0xff] %vm447, %v422
    %456 = vst.msk [vmem:[#allocation2 + $0x40] sm:$0xff] %vm447, %v423
    %457 = vst.msk [vmem:[#allocation2 + $0x48] sm:$0xff] %vm447, %v424
    %458 = vst.msk [vmem:[#allocation2 + $0x50] sm:$0xff] %vm447, %v425
    %459 = vst.msk [vmem:[#allocation2 + $0x58] sm:$0xff] %vm447, %v426
    %460 = vst.msk [vmem:[#allocation2 + $0x60] sm:$0xff] %vm447, %v427
    %461 = vst.msk [vmem:[#allocation2 + $0x68] sm:$0xff] %vm447, %v428
    %462 = vst.msk [vmem:[#allocation2 + $0x70] sm:$0xff] %vm447, %v429
    %463 = vst.msk [vmem:[#allocation2 + $0x78] sm:$0xff] %vm447, %v430
    %464 = vst.msk [vmem:[#allocation2 + $0x80] sm:$0xff] %vm447, %v431
    %465 = vst.msk [vmem:[#allocation2 + $0x88] sm:$0xff] %vm447, %v432
    %466 = vst.msk [vmem:[#allocation2 + $0x90] sm:$0xff] %vm447, %v433
    %467 = vst.msk [vmem:[#allocation2 + $0x98] sm:$0xff] %vm447, %v434
    %468 = vst.msk [vmem:[#allocation2 + $0xa0] sm:$0xff] %vm447, %v435
    %469 = vst.msk [vmem:[#allocation2 + $0xa8] sm:$0xff] %vm447, %v436
    %470 = vst.msk [vmem:[#allocation2 + $0xb0] sm:$0xff] %vm447, %v437
    %471 = vst.msk [vmem:[#allocation2 + $0xb8] sm:$0xff] %vm447, %v438
    %472 = vst.msk [vmem:[#allocation2 + $0xc0] sm:$0xff] %vm447, %v439
    %473 = vst.msk [vmem:[#allocation2 + $0xc8] sm:$0xff] %vm447, %v440
    %474 = vst.msk [vmem:[#allocation2 + $0xd0] sm:$0xff] %vm447, %v441
    %475 = vst.msk [vmem:[#allocation2 + $0xd8] sm:$0xff] %vm447, %v442
    %476 = vst.msk [vmem:[#allocation2 + $0xe0] sm:$0xff] %vm447, %v443
    %477 = vst.msk [vmem:[#allocation2 + $0xe8] sm:$0xff] %vm447, %v444
    %478 = vst.msk [vmem:[#allocation2 + $0xf0] sm:$0xff] %vm447, %v445
    %479 = vst.msk [vmem:[#allocation2 + $0xf8] sm:$0xff] %vm447, %v446
    // Predicated region
    $region18: #{tpu_custom_call.1} parent=1 // pred_check
      %p480 = pneg %p25
    $region19: #{tpu_custom_call.1} parent=1 // pred_check_branch
      %482 = sbr.rel (%p480) target = $region21
    $region20: #{tpu_custom_call.1} parent=1 // pred_region
      %v483 = vld [vmem:[#allocation2] sm:$0xff]
      %v484 = vld [vmem:[#allocation2 + $0x8] sm:$0xff]
      %v485 = vld [vmem:[#allocation2 + $0x10] sm:$0xff]
      %v486 = vld [vmem:[#allocation2 + $0x18] sm:$0xff]
      %v487 = vld [vmem:[#allocation2 + $0x20] sm:$0xff]
      %v488 = vld [vmem:[#allocation2 + $0x28] sm:$0xff]
      %v489 = vld [vmem:[#allocation2 + $0x30] sm:$0xff]
      %v490 = vld [vmem:[#allocation2 + $0x38] sm:$0xff]
      %v491 = vld [vmem:[#allocation2 + $0x40] sm:$0xff]
      %v492 = vld [vmem:[#allocation2 + $0x48] sm:$0xff]
      %v493 = vld [vmem:[#allocation2 + $0x50] sm:$0xff]
      %v494 = vld [vmem:[#allocation2 + $0x58] sm:$0xff]
      %v495 = vld [vmem:[#allocation2 + $0x60] sm:$0xff]
      %v496 = vld [vmem:[#allocation2 + $0x68] sm:$0xff]
      %v497 = vld [vmem:[#allocation2 + $0x70] sm:$0xff]
      %v498 = vld [vmem:[#allocation2 + $0x78] sm:$0xff]
      %v499 = vld [vmem:[#allocation2 + $0x80] sm:$0xff]
      %v500 = vld [vmem:[#allocation2 + $0x88] sm:$0xff]
      %v501 = vld [vmem:[#allocation2 + $0x90] sm:$0xff]
      %v502 = vld [vmem:[#allocation2 + $0x98] sm:$0xff]
      %v503 = vld [vmem:[#allocation2 + $0xa0] sm:$0xff]
      %v504 = vld [vmem:[#allocation2 + $0xa8] sm:$0xff]
      %v505 = vld [vmem:[#allocation2 + $0xb0] sm:$0xff]
      %v506 = vld [vmem:[#allocation2 + $0xb8] sm:$0xff]
      %v507 = vld [vmem:[#allocation2 + $0xc0] sm:$0xff]
      %v508 = vld [vmem:[#allocation2 + $0xc8] sm:$0xff]
      %v509 = vld [vmem:[#allocation2 + $0xd0] sm:$0xff]
      %v510 = vld [vmem:[#allocation2 + $0xd8] sm:$0xff]
      %v511 = vld [vmem:[#allocation2 + $0xe0] sm:$0xff]
      %v512 = vld [vmem:[#allocation2 + $0xe8] sm:$0xff]
      %v513 = vld [vmem:[#allocation2 + $0xf0] sm:$0xff]
      %v514 = vld [vmem:[#allocation2 + $0xf8] sm:$0xff]
      %515 = vst.msk [vmem:[%s2] sm:$0xff] %vm447, %v483
      %516 = vst.msk [vmem:[%s2 + $0x8] sm:$0xff] %vm447, %v484
      %517 = vst.msk [vmem:[%s2 + $0x10] sm:$0xff] %vm447, %v485
      %518 = vst.msk [vmem:[%s2 + $0x18] sm:$0xff] %vm447, %v486
      %519 = vst.msk [vmem:[%s2 + $0x20] sm:$0xff] %vm447, %v487
      %520 = vst.msk [vmem:[%s2 + $0x28] sm:$0xff] %vm447, %v488
      %521 = vst.msk [vmem:[%s2 + $0x30] sm:$0xff] %vm447, %v489
      %522 = vst.msk [vmem:[%s2 + $0x38] sm:$0xff] %vm447, %v490
      %523 = vst.msk [vmem:[%s2 + $0x40] sm:$0xff] %vm447, %v491
      %524 = vst.msk [vmem:[%s2 + $0x48] sm:$0xff] %vm447, %v492
      %525 = vst.msk [vmem:[%s2 + $0x50] sm:$0xff] %vm447, %v493
      %526 = vst.msk [vmem:[%s2 + $0x58] sm:$0xff] %vm447, %v494
      %527 = vst.msk [vmem:[%s2 + $0x60] sm:$0xff] %vm447, %v495
      %528 = vst.msk [vmem:[%s2 + $0x68] sm:$0xff] %vm447, %v496
      %529 = vst.msk [vmem:[%s2 + $0x70] sm:$0xff] %vm447, %v497
      %530 = vst.msk [vmem:[%s2 + $0x78] sm:$0xff] %vm447, %v498
      %531 = vst.msk [vmem:[%s2 + $0x80] sm:$0xff] %vm447, %v499
      %532 = vst.msk [vmem:[%s2 + $0x88] sm:$0xff] %vm447, %v500
      %533 = vst.msk [vmem:[%s2 + $0x90] sm:$0xff] %vm447, %v501
      %534 = vst.msk [vmem:[%s2 + $0x98] sm:$0xff] %vm447, %v502
      %535 = vst.msk [vmem:[%s2 + $0xa0] sm:$0xff] %vm447, %v503
      %536 = vst.msk [vmem:[%s2 + $0xa8] sm:$0xff] %vm447, %v504
      %537 = vst.msk [vmem:[%s2 + $0xb0] sm:$0xff] %vm447, %v505
      %538 = vst.msk [vmem:[%s2 + $0xb8] sm:$0xff] %vm447, %v506
      %539 = vst.msk [vmem:[%s2 + $0xc0] sm:$0xff] %vm447, %v507
      %540 = vst.msk [vmem:[%s2 + $0xc8] sm:$0xff] %vm447, %v508
      %541 = vst.msk [vmem:[%s2 + $0xd0] sm:$0xff] %vm447, %v509
      %542 = vst.msk [vmem:[%s2 + $0xd8] sm:$0xff] %vm447, %v510
      %543 = vst.msk [vmem:[%s2 + $0xe0] sm:$0xff] %vm447, %v511
      %544 = vst.msk [vmem:[%s2 + $0xe8] sm:$0xff] %vm447, %v512
      %545 = vst.msk [vmem:[%s2 + $0xf0] sm:$0xff] %vm447, %v513
      %546 = vst.msk [vmem:[%s2 + $0xf8] sm:$0xff] %vm447, %v514
    $region21: #{tpu_custom_call.1} parent=1 // pred_fallthru
      _
    // Predicated region
    $region22: #{tpu_custom_call.1} parent=1 // pred_check
      _
    $region23: #{tpu_custom_call.1} parent=1 // pred_check_branch
      %548 = sbr.rel (0) target = $region25
    $region24: #{tpu_custom_call.1} parent=1 // pred_region
      _
    $region25: #{tpu_custom_call.1} parent=1 // pred_fallthru
      _
    // Predicated region
    $region26: #{tpu_custom_call.1} parent=1 // pred_check
      _
    $region27: #{tpu_custom_call.1} parent=1 // pred_check_branch
      %550 = sbr.rel (0) target = $region29
    $region28: #{tpu_custom_call.1} parent=1 // pred_region
      _
    $region29: #{tpu_custom_call.1} parent=1 // pred_fallthru
      _
    %551 = vsyncpa [#allocation4], 1

</llo_original>
